<compile_context>
chip_gen: v5e
topology: v5e:2x2
jax: 0.10.0
libtpu: 0.0.40
codegen_flags: <defaults>
</compile_context>

<pallas_src>
import functools

import numpy as np
import jax
import jax.numpy as jnp
from jax.experimental import pallas as pl
from jax.experimental.pallas import tpu as pltpu


DEFAULT_TILE_M = 512   # frame rows per grid step (multiple of 16)


def _round_up(x, m):
    return ((x + m - 1) // m) * m


def _cdiv(a, b):
    return -(-a // b)


# ----------------------- parameter construction (numpy, deterministic) ---------

def _symmetric_hann(win_length):
    # librosa.filters.get_window('hann', win_length, fftbins=False)
    n = np.arange(win_length, dtype=np.float64)
    return 0.5 - 0.5 * np.cos(2.0 * np.pi * n / (win_length - 1))


def _stft_conv_weights(n_fft, win_length, n_bins):
    """Weights of STFT.conv_real / conv_imag, laid out for `frames @ W`.

    Only the first `n_bins` DFT bins are produced (the Nyquist bin is dropped
    by the caller because the Kaldi mel filterbank column for it is zero).
    """
    win = _symmetric_hann(win_length)
    lpad = (n_fft - win_length) // 2          # librosa.util.pad_center
    window = np.zeros(n_fft, dtype=np.float64)
    window[lpad:lpad + win_length] = win
    n = np.arange(n_fft, dtype=np.float64)[:, None]
    k = np.arange(n_bins, dtype=np.float64)[None, :]
    ang = 2.0 * np.pi * n * k / n_fft         # DFT matrix angles
    w_real = np.cos(ang) * window[:, None]    # (n_fft, n_bins)
    w_imag = -np.sin(ang) * window[:, None]   # (n_fft, n_bins)
    return w_real.astype(np.float32), w_imag.astype(np.float32)


def _kaldi_mel_banks(num_bins, window_length_padded, sample_freq, low_freq, high_freq):
    """numpy port of torchaudio.compliance.kaldi.get_mel_banks (vtln_warp_factor=1)."""
    num_fft_bins = window_length_padded // 2
    nyquist = 0.5 * sample_freq
    if high_freq <= 0.0:
        high_freq += nyquist
    fft_bin_width = sample_freq / window_length_padded
    mel = lambda f: 1127.0 * np.log(1.0 + np.asarray(f, dtype=np.float64) / 700.0)
    mel_low, mel_high = mel(low_freq), mel(high_freq)
    mel_delta = (mel_high - mel_low) / (num_bins + 1)
    b = np.arange(num_bins, dtype=np.float64)[:, None]
    left = mel_low + b * mel_delta
    center = mel_low + (b + 1.0) * mel_delta
    right = mel_low + (b + 2.0) * mel_delta
    freqs = mel(fft_bin_width * np.arange(num_fft_bins, dtype=np.float64))[None, :]
    up = (freqs - left) / (center - left)
    down = (right - freqs) / (right - center)
    fb = np.maximum(0.0, np.minimum(up, down))
    return fb.astype(np.float32)              # (num_bins, n_fft // 2)


# ----------------------------------- kernel ------------------------------------

def _melspec_kernel(frames_ref, wcat_ref, melT_ref, o_ref, *, f_pad, compute_dtype):
    fr = frames_ref[...]
    # Two (tm, F) MXU passes instead of one (tm, 2F) pass: identical FLOPs but
    # only one (tm, F) f32 temp is live at a time next to `spec`, which keeps
    # large-tm configs comfortably inside v7x's 64 MiB VMEM.
    real = jnp.dot(fr, wcat_ref[:, :f_pad], preferred_element_type=jnp.float32)
    spec = real * real
    imag = jnp.dot(fr, wcat_ref[:, f_pad:], preferred_element_type=jnp.float32)
    spec = spec + imag * imag                          # power spectrum (power=2.0)
    # bf16 mel contraction (only ~6% of the MXU FLOPs).  Keeping `spec` in f32
    # here would tighten accuracy vs the fp32 reference at some MXU cost.
    mel = jnp.dot(spec.astype(compute_dtype), melT_ref[...],
                  preferred_element_type=jnp.float32)
    # log(mel + 1e-5) then (x + 4.5) / 5  ==  log(...) * 0.2 + 0.9
    o_ref[...] = jnp.log(mel + 1e-5) * 0.2 + 0.9


# ----------------------------------- wrapper ------------------------------------

class MelSpectrogramPallas:
    def __init__(self, n_fft=1024, win_length=800, hopsize=320, sr=32000,
                 n_mels=128, fmin=0, fmax=None, tile_m=None,
                 compute_dtype=jnp.bfloat16):
        self.n_fft = n_fft
        self.hop = hopsize
        self.n_mels = n_mels
        self.tile_m = _round_up(max(16, DEFAULT_TILE_M if tile_m is None else tile_m), 16)
        self.compute_dtype = compute_dtype

        # The Nyquist STFT bin (index n_fft//2) only ever multiplies the
        # all-zero padded column of the Kaldi mel filterbank, so dropping it
        # here is numerically exact and removes dead matmul work.
        n_bins = n_fft // 2
        w_real, w_imag = _stft_conv_weights(n_fft, win_length, n_bins)
        if fmax is None:
            fmax = sr // 2
        melW = _kaldi_mel_banks(n_mels, n_fft, sr, float(fmin), float(fmax))

        # Pad contraction / lane dims to multiples of 128 with zeros
        # (zero rows/columns do not change the math).  For the power-of-two
        # n_fft values used by PASST these are all no-ops.
        self.K_pad = _round_up(n_fft, 128)
        self.F_pad = _round_up(n_bins, 128)
        self.NM_pad = _round_up(n_mels, 128)

        wr = np.pad(w_real, ((0, self.K_pad - n_fft), (0, self.F_pad - n_bins)))
        wi = np.pad(w_imag, ((0, self.K_pad - n_fft), (0, self.F_pad - n_bins)))
        self.wcat = jnp.asarray(np.concatenate([wr, wi], axis=1),
                                dtype=compute_dtype)          # (K, 2F)
        melT = np.pad(melW.T, ((0, self.F_pad - n_bins),
                               (0, self.NM_pad - n_mels)))    # (F, n_mels_pad)
        self.melT = jnp.asarray(melT, dtype=compute_dtype)

        self._forward = jax.jit(self._forward_impl)

    # --- framing via hop-strided slices + concat (no XLA gather) ---
    # TODO(synk): framing could move fully in-kernel (memory_space=pl.ANY input
    # + manual double-buffered DMA of the overlapping per-tile span, assembled
    # in VMEM) so the 3.2x-expanded frames tensor never touches HBM; deferred
    # because the in-VMEM assembly needs lane-misaligned (hop-width) concats.
    def _frame(self, yp, n_frames_out):
        """(B, L) bf16 -> (B, n_frames_out, n_fft) bf16, hop-strided frames.

        Any zero padding needed to reach n_frames_out rows (and enough
        samples) is applied to yp (3.2x smaller than the frames tensor), so
        the expanded frames tensor is materialized exactly once, already in
        the layout the kernel consumes.
        """
        B = yp.shape[0]
        hop, n_fft = self.hop, self.n_fft
        n_chunks = _cdiv(n_fft, hop)
        rows = n_frames_out + n_chunks - 1
        l_need = rows * hop
        l_have = yp.shape[1]
        if l_need > l_have:
            yp = jnp.pad(yp, ((0, 0), (0, l_need - l_have)))
        elif l_need < l_have:
            yp = yp[:, :l_need]
        z = yp.reshape(B, rows, hop)
        last_w = n_fft - (n_chunks - 1) * hop
        parts = [z[:, a:a + n_frames_out, :] for a in range(n_chunks - 1)]
        parts.append(z[:, n_chunks - 1:n_chunks - 1 + n_frames_out, :last_w])
        return jnp.concatenate(parts, axis=2)        # (B, n_frames_out, n_fft)

    def _forward_impl(self, x):
        B, T = x.shape
        x = x.astype(jnp.float32)

        # Pre-emphasis y[t] = x[t+1] - 0.97*x[t]: trivially memory-bound, left
        # to XLA (fuses with the reflect pad; no whole-array VMEM requirement).
        y = x[:, 1:] - 0.97 * x[:, :-1]

        pad = self.n_fft // 2
        yp = jnp.pad(y, ((0, 0), (pad, pad)), mode="reflect")
        yp = yp.astype(self.compute_dtype)            # bf16 framing -> half HBM

        n_frames = (T - 1) // self.hop + 1

        # Frame-row tile: M just streams through the MXU, so take the biggest
        # tile (default 512) that the data supports, rounded to 16 (bf16
        # sublane packing), while keeping >=2 grid steps overall so both v7x
        # TensorCores get work on short clips.
        tm = min(self.tile_m, _round_up(n_frames, 16))
        if B * _cdiv(n_frames, tm) < 2 and n_frames > 16:
            tm = _round_up(_cdiv(n_frames, 2), 16)
        n_tiles = _cdiv(n_frames, tm)
        n_frames_pad = n_tiles * tm

        # Frames already in the final padded layout -> no extra pad copy.
        frames = self._frame(yp, n_frames_pad)        # (B, n_frames_pad, n_fft)
        if self.K_pad != self.n_fft:                  # never for power-of-two n_fft
            frames = jnp.pad(frames,
                             ((0, 0), (0, 0), (0, self.K_pad - self.n_fft)))

        K, F, NM = self.K_pad, self.F_pad, self.NM_pad
        kernel = functools.partial(_melspec_kernel, f_pad=F,
                                   compute_dtype=self.compute_dtype)
        out = pl.pallas_call(
            kernel,
            out_shape=jax.ShapeDtypeStruct((B, n_frames_pad, NM), jnp.float32),
            grid_spec=pltpu.PrefetchScalarGridSpec(
                num_scalar_prefetch=0,
                grid=(B, n_tiles),
                in_specs=[
                    # leading batch dim squeezed out of the block.
                    pl.BlockSpec((None, tm, K), lambda b, i: (b, i, 0)),
                    # Block-invariant weights (constant index_map -> the
                    # pipeliner copies them in only once).  VMEM at tm=512 is
                    # ~10 MiB, well under the 32 MiB limit below, so the extra
                    # pipeline buffer is harmless.
                    # TODO(synk): single-buffer via pipeline_mode=pl.Buffered(1)
                    # when pushing tm to 1024 on v7x.
                    pl.BlockSpec((K, 2 * F), lambda b, i: (0, 0)),
                    pl.BlockSpec((F, NM), lambda b, i: (0, 0)),
                ],
                out_specs=pl.BlockSpec((None, tm, NM), lambda b, i: (b, i, 0)),
            ),
            compiler_params=pltpu.CompilerParams(
                dimension_semantics=("parallel", "parallel"),
                vmem_limit_bytes=32 * 1024 * 1024),
        )(frames, self.wcat, self.melT)

        out = out[:, :n_frames, :self.n_mels]         # drop padded rows / lanes
        # PyTorch module returns (batch, 1, n_mels, time_steps).
        return jnp.transpose(out, (0, 2, 1))[:, None]

    def __call__(self, x):
        return self._forward(x)


if __name__ == "__main__":
    key = jax.random.PRNGKey(0)
    B, T = 2, 2048
    x = jax.random.normal(key, (B, T), dtype=jnp.float32)

    # Small, shape-consistent configuration of the module.
    model = MelSpectrogramPallas(n_fft=256, win_length=200, hopsize=64,
                                 sr=8000, n_mels=128, fmin=0, fmax=None)
    out = jax.block_until_ready(model(x))

    n_frames = (T - 1) // 64 + 1
    assert out.shape == (B, 1, 128, n_frames), out.shape
    assert bool(jnp.all(jnp.isfinite(out)))
    print("KERNEL_OK")
</pallas_src>

<mosaic_0001>
module attributes {stable_mosaic.version = 11 : i64} {
  func.func @_melspec_kernel(%arg0: i32, %arg1: i32, %arg2: memref<1x32x256xbf16, #tpu.memory_space<vmem>>, %arg3: memref<256x256xbf16, #tpu.memory_space<vmem>>, %arg4: memref<128x128xbf16, #tpu.memory_space<vmem>>, %arg5: memref<1x32x128xf32, #tpu.memory_space<vmem>>) attributes {dimension_semantics = [#tpu.dimension_semantics<parallel>, #tpu.dimension_semantics<parallel>], iteration_bounds = array<i64: 2, 1>, scalar_prefetch = 0 : i64, scratch_operands = 0 : i64, tpu.core_type = #tpu.core_type<tc>, window_params = [{transform_indices = @transform_0, window_bounds = array<i64: 1, 32, 256>}, {pipeline_mode = #tpu.pipeline_mode<synchronous>, transform_indices = @transform_1, window_bounds = array<i64: 256, 256>}, {pipeline_mode = #tpu.pipeline_mode<synchronous>, transform_indices = @transform_2, window_bounds = array<i64: 128, 128>}, {transform_indices = @transform_3, window_bounds = array<i64: 1, 32, 128>}]} {
    %c0 = arith.constant 0 : index
    %c0_0 = arith.constant 0 : index
    %c0_1 = arith.constant 0 : index
    %0 = vector.load %arg2[%c0, %c0_0, %c0_1] : memref<1x32x256xbf16, #tpu.memory_space<vmem>>, vector<1x32x256xbf16>
    %1 = vector.shape_cast %0 : vector<1x32x256xbf16> to vector<32x256xbf16>
    %c0_2 = arith.constant 0 : index
    %c0_3 = arith.constant 0 : index
    %2 = vector.load %arg3[%c0_2, %c0_3] : memref<256x256xbf16, #tpu.memory_space<vmem>>, vector<256x128xbf16>
    %cst = arith.constant dense<0.000000e+00> : vector<32x128xf32>
    %3 = tpu.matmul %1, %2, %cst {dimension_numbers = #tpu.dot_dimension_numbers<[1], [0], [0], [1], [0, 0, 1, 1], [], []>} : vector<32x256xbf16>, vector<256x128xbf16>, vector<32x128xf32> -> vector<32x128xf32>
    %4 = arith.mulf %3, %3 : vector<32x128xf32>
    %c0_4 = arith.constant 0 : index
    %c128 = arith.constant 128 : index
    %5 = vector.load %arg3[%c0_4, %c128] : memref<256x256xbf16, #tpu.memory_space<vmem>>, vector<256x128xbf16>
    %cst_5 = arith.constant dense<0.000000e+00> : vector<32x128xf32>
    %6 = tpu.matmul %1, %5, %cst_5 {dimension_numbers = #tpu.dot_dimension_numbers<[1], [0], [0], [1], [0, 0, 1, 1], [], []>} : vector<32x256xbf16>, vector<256x128xbf16>, vector<32x128xf32> -> vector<32x128xf32>
    %7 = arith.mulf %6, %6 : vector<32x128xf32>
    %8 = arith.addf %4, %7 : vector<32x128xf32>
    %9 = arith.truncf %8 : vector<32x128xf32> to vector<32x128xbf16>
    %c0_6 = arith.constant 0 : index
    %c0_7 = arith.constant 0 : index
    %10 = vector.load %arg4[%c0_6, %c0_7] : memref<128x128xbf16, #tpu.memory_space<vmem>>, vector<128x128xbf16>
    %cst_8 = arith.constant dense<0.000000e+00> : vector<32x128xf32>
    %11 = tpu.matmul %9, %10, %cst_8 {dimension_numbers = #tpu.dot_dimension_numbers<[1], [0], [0], [1], [0, 0, 1, 1], [], []>} : vector<32x128xbf16>, vector<128x128xbf16>, vector<32x128xf32> -> vector<32x128xf32>
    %cst_9 = arith.constant 9.99999974E-6 : f32
    %12 = vector.broadcast %cst_9 : f32 to vector<32x128xf32>
    %13 = arith.addf %11, %12 : vector<32x128xf32>
    %14 = math.log %13 : vector<32x128xf32>
    %cst_10 = arith.constant 2.000000e-01 : f32
    %15 = vector.broadcast %cst_10 : f32 to vector<32x128xf32>
    %16 = arith.mulf %14, %15 : vector<32x128xf32>
    %cst_11 = arith.constant 0.899999976 : f32
    %17 = vector.broadcast %cst_11 : f32 to vector<32x128xf32>
    %18 = arith.addf %16, %17 : vector<32x128xf32>
    %c0_12 = arith.constant 0 : index
    %c0_13 = arith.constant 0 : index
    %c0_14 = arith.constant 0 : index
    %19 = vector.load %arg5[%c0_12, %c0_13, %c0_14] : memref<1x32x128xf32, #tpu.memory_space<vmem>>, vector<1x32x128xf32>
    %20 = vector.shape_cast %19 : vector<1x32x128xf32> to vector<32x128xf32>
    %21 = vector.shape_cast %18 : vector<32x128xf32> to vector<1x32x128xf32>
    tpu.vector_store %arg5[%c0_12, %c0_13, %c0_14], %21 {strides = array<i32>} : memref<1x32x128xf32, #tpu.memory_space<vmem>>, vector<1x32x128xf32>,
    return
  }
  func.func @transform_0(%arg0: i32, %arg1: i32) -> (i32, i32, i32) {
    %c0_i32 = arith.constant 0 : i32
    %c0_i32_0 = arith.constant 0 : i32
    return %arg0, %arg1, %c0_i32 : i32, i32, i32
  }
  func.func @transform_1(%arg0: i32, %arg1: i32) -> (i32, i32) {
    %c0_i32 = arith.constant 0 : i32
    %c0_i32_0 = arith.constant 0 : i32
    %c0_i32_1 = arith.constant 0 : i32
    return %c0_i32, %c0_i32_0 : i32, i32
  }
  func.func @transform_2(%arg0: i32, %arg1: i32) -> (i32, i32) {
    %c0_i32 = arith.constant 0 : i32
    %c0_i32_0 = arith.constant 0 : i32
    %c0_i32_1 = arith.constant 0 : i32
    return %c0_i32, %c0_i32_0 : i32, i32
  }
  func.func @transform_3(%arg0: i32, %arg1: i32) -> (i32, i32, i32) {
    %c0_i32 = arith.constant 0 : i32
    %c0_i32_0 = arith.constant 0 : i32
    return %arg0, %arg1, %c0_i32 : i32, i32, i32
  }
}

</mosaic_0001>

<llo_original>
// kernel: _forward_impl.1
$region0: #{_forward_impl.1}
  #allocation0 [shape = 'u32[]', space=smem, size = 0x4, offset = 0x4, fixed_abs, tag = 'smem constant byte address 0x4 - core index']
  #allocation1 [shape = 'u32[72,128]{1,0:T(1,128)}', space=vmem, size = 0x9000, scoped, tag = 'internal scratch']
  %s0 = inlined_call_operand.vmem [shape: bf16[2,32,256], index: 0, kind: input, shape index: {}]
  %s1 = inlined_call_operand.vmem [shape: bf16[256,256], index: 1, kind: input, shape index: {}]
  %s2 = inlined_call_operand.vmem [shape: bf16[128,128], index: 2, kind: input, shape index: {}]
  %s3 = inlined_call_operand.hbm [shape: f32[2,32,128], index: 3, kind: output, shape index: {}]
  %s4 = sld [smem:[#allocation0]]
  $region45: #{_forward_impl.1} parent=0
    _
  %s6 = ssub.s32 1, %s4
  %s7 = scalar_select 0, %s6, %s4
  $region1: #{_forward_impl.1} parent=0
    #allocation2 [shape = 'u8[32768]{0}', space=vmem, size = 0x8000, scoped, tag = 'output window, operand 0']
    #allocation3 [shape = 's32[2]{0}', space=sflag, size = 0x8, scoped, tag = 'scoped memory for _forward_impl.1']
    %8 = vsyncpa [#allocation3], 0
    %s9 = scalar_lea.sflag [#allocation3], 1
    %10 = vsyncpa %s9, 0
    loop: start=0, step=1, limit=4
    $region2: #{_forward_impl.1} parent=1 // loop_pre_header
      _
    $region3: #{_forward_impl.1} parent=1 // loop_header
      %s12 = sphi 0, %s16
      %p13 = scmp.ge.s32.totalorder %s12, 4
      %s19 = sphi 0, %s31
      %s20 = sphi 0, %s27
      %s21 = sphi 0, %s19
      %s22 = sphi 0, %s20
      %s23 = sphi 0, %s21
      %s24 = sphi 0, %s22
      %s36 = sphi 0, %s38
      %s39 = sphi 0, %s36
      %s40 = sphi 0, %s39
      %s56 = sphi 0, %s40
      %s60 = sphi 0, %s60
      %s62 = sphi 0, %s60
      %s63 = sphi 0, %s62
      %s77 = sphi 0, %s63
      %s81 = sphi 0, %s81
      %s83 = sphi 0, %s81
      %s84 = sphi 0, %s83
      %s98 = sphi 0, %s84
      %s106 = sphi 0, %s108
      %s109 = sphi 0, %s106
      %s110 = sphi 0, %s109
      %s126 = sphi 0, %s110
    $region4: #{_forward_impl.1} parent=1 // loop_header_branch
      %15 = sbr.rel (%p13) target = $region8
    $region5: #{_forward_impl.1} parent=1 // loop_body
      %s17 = ssub.s32 %s12, 1
      %s18 = ssub.s32 %s12, 2
      %s25 = sadd.s32 1, %s20
      %p26 = scmp.ge.s32.totalorder %s25, 1
      %s27 = scalar_select %p26, 0, %s25
      %s28 = sadd.s32 1, %s19
      %s29 = scalar_select %p26, %s28, %s19
      %p30 = scmp.ge.s32.totalorder %s29, 2
      %s31 = scalar_select %p30, 0, %s29
      %s32 = ssub.s32 %s19, %s31
      %s33 = ssub.s32 %s20, %s27
      %s34 = sor.u32 %s32, %s33
      %p35 = scmp.eq.s32.totalorder %s34, 0
      %s37 = sadd.s32 %s36, 1
      %s38 = scalar_select %p35, %s36, %s37
      %p41 = pneg %p35
      %p42 = scmp.eq.s32.totalorder %s12, 1
      %p43 = por %p41, %p42
      %p44 = scmp.ne.s32.totalorder %s36, %s39
      %p45 = scmp.eq.s32.totalorder %s12, 0
      %p46 = por %p44, %p45
      %p47 = scmp.ne.s32.totalorder %s36, %s39
      %p48 = scmp.eq.s32.totalorder %s17, 1
      %p49 = por %p47, %p48
      %p50 = scmp.ne.s32.totalorder %s39, %s40
      %p51 = scmp.eq.s32.totalorder %s17, 0
      %p52 = por %p50, %p51
      %p53 = scmp.ne.s32.totalorder %s39, %s40
      %p54 = scmp.eq.s32.totalorder %s18, 1
      %p55 = por %p53, %p54
      %p57 = scmp.ne.s32.totalorder %s40, %s56
      %p58 = scmp.eq.s32.totalorder %s18, 0
      %p59 = por %p57, %p58
      %s61 = sadd.s32 %s60, 1
      %p64 = scmp.eq.s32.totalorder %s12, 1
      %p65 = scmp.ne.s32.totalorder %s60, %s62
      %p66 = scmp.eq.s32.totalorder %s12, 0
      %p67 = por %p65, %p66
      %p68 = scmp.ne.s32.totalorder %s60, %s62
      %p69 = scmp.eq.s32.totalorder %s17, 1
      %p70 = por %p68, %p69
      %p71 = scmp.ne.s32.totalorder %s62, %s63
      %p72 = scmp.eq.s32.totalorder %s17, 0
      %p73 = por %p71, %p72
      %p74 = scmp.ne.s32.totalorder %s62, %s63
      %p75 = scmp.eq.s32.totalorder %s18, 1
      %p76 = por %p74, %p75
      %p78 = scmp.ne.s32.totalorder %s63, %s77
      %p79 = scmp.eq.s32.totalorder %s18, 0
      %p80 = por %p78, %p79
      %s82 = sadd.s32 %s81, 1
      %p85 = scmp.eq.s32.totalorder %s12, 1
      %p86 = scmp.ne.s32.totalorder %s81, %s83
      %p87 = scmp.eq.s32.totalorder %s12, 0
      %p88 = por %p86, %p87
      %p89 = scmp.ne.s32.totalorder %s81, %s83
      %p90 = scmp.eq.s32.totalorder %s17, 1
      %p91 = por %p89, %p90
      %p92 = scmp.ne.s32.totalorder %s83, %s84
      %p93 = scmp.eq.s32.totalorder %s17, 0
      %p94 = por %p92, %p93
      %p95 = scmp.ne.s32.totalorder %s83, %s84
      %p96 = scmp.eq.s32.totalorder %s18, 1
      %p97 = por %p95, %p96
      %p99 = scmp.ne.s32.totalorder %s84, %s98
      %p100 = scmp.eq.s32.totalorder %s18, 0
      %p101 = por %p99, %p100
      %s102 = ssub.s32 %s19, %s31
      %s103 = ssub.s32 %s20, %s27
      %s104 = sor.u32 %s102, %s103
      %p105 = scmp.eq.s32.totalorder %s104, 0
      %s107 = sadd.s32 %s106, 1
      %s108 = scalar_select %p105, %s106, %s107
      %p111 = pneg %p105
      %p112 = scmp.eq.s32.totalorder %s12, 1
      %p113 = por %p111, %p112
      %p114 = scmp.ne.s32.totalorder %s106, %s109
      %p115 = scmp.eq.s32.totalorder %s12, 0
      %p116 = por %p114, %p115
      %p117 = scmp.ne.s32.totalorder %s106, %s109
      %p118 = scmp.eq.s32.totalorder %s17, 1
      %p119 = por %p117, %p118
      %p120 = scmp.ne.s32.totalorder %s109, %s110
      %p121 = scmp.eq.s32.totalorder %s17, 0
      %p122 = por %p120, %p121
      %p123 = scmp.ne.s32.totalorder %s109, %s110
      %p124 = scmp.eq.s32.totalorder %s18, 1
      %p125 = por %p123, %p124
      %p127 = scmp.ne.s32.totalorder %s110, %s126
      %p128 = scmp.eq.s32.totalorder %s18, 0
      %p129 = por %p127, %p128
      %p130 = scmp.le.s32.totalorder 1, %s12
      %p131 = scmp.lt.s32.totalorder %s12, 3
      %p132 = pnand %p130, %p131
      %p133 = pneg %p132
      // Predicated region
      $region9: #{_forward_impl.1} parent=5 // pred_check
        _
      $region10: #{_forward_impl.1} parent=5 // pred_check_branch
        %135 = sbr.rel (%p132) target = $region12
      $region11: #{_forward_impl.1} parent=5 // pred_region
        %s136 = ssub.s32 %s12, 1
        // Predicated region
        $region13: #{_forward_impl.1} parent=11 // pred_check
          %p137 = pneg %p73
        $region14: #{_forward_impl.1} parent=11 // pred_check_branch
          %139 = sbr.rel (%p137) target = $region16
        $region15: #{_forward_impl.1} parent=11 // pred_region
          _
        $region16: #{_forward_impl.1} parent=11 // pred_fallthru
          _
        // Predicated region
        $region17: #{_forward_impl.1} parent=11 // pred_check
          %p140 = pneg %p94
        $region18: #{_forward_impl.1} parent=11 // pred_check_branch
          %142 = sbr.rel (%p140) target = $region20
        $region19: #{_forward_impl.1} parent=11 // pred_region
          _
        $region20: #{_forward_impl.1} parent=11 // pred_fallthru
          _
      $region12: #{_forward_impl.1} parent=5 // pred_fallthru
        _
      %p143 = scmp.lt.s32.totalorder %s12, 2
      // Predicated region
      $region21: #{_forward_impl.1} parent=5 // pred_check
        %p144 = pneg %p143
      $region22: #{_forward_impl.1} parent=5 // pred_check_branch
        %146 = sbr.rel (%p144) target = $region24
      $region23: #{_forward_impl.1} parent=5 // pred_region
        // Predicated region
        $region25: #{_forward_impl.1} parent=23 // pred_check
          %p147 = pneg %p46
        $region26: #{_forward_impl.1} parent=23 // pred_check_branch
          %149 = sbr.rel (%p147) target = $region28
        $region27: #{_forward_impl.1} parent=23 // pred_region
          %s150 = smul.u32 4, %s20
          %p151 = scmp.lt.s32.totalorder %s19, 1
          %s152 = scalar_select %p151, %s19, 1
          %p153 = scmp.lt.s32.totalorder %s150, 3
          %s154 = scalar_select %p153, %s150, 3
          %s155 = smul.addr %s154, 2
          %s156 = smul.addr %s152, 8
          %s157 = sadd.s32 %s155, %s156
          %s158 = smul.addr %s157, 4
          %s159 = scalar_lea.vmem %s0, %s158
          %s160 = smul.u32 4, %s20
        $region28: #{_forward_impl.1} parent=23 // pred_fallthru
          _
      $region24: #{_forward_impl.1} parent=5 // pred_fallthru
        _
      %p161 = scmp.le.s32.totalorder 1, %s12
      %p162 = scmp.lt.s32.totalorder %s12, 3
      %p163 = pnand %p161, %p162
      %p164 = pneg %p163
      // Predicated region
      $region29: #{_forward_impl.1} parent=5 // pred_check
        _
      $region30: #{_forward_impl.1} parent=5 // pred_check_branch
        %166 = sbr.rel (%p163) target = $region32
      $region31: #{_forward_impl.1} parent=5 // pred_region
        %s167 = ssub.s32 %s12, 1
        %s168 = smul.u32 4, %s22
        %p169 = scmp.lt.s32.totalorder %s21, 1
        %s170 = scalar_select %p169, %s21, 1
        %p171 = scmp.lt.s32.totalorder %s168, 3
        %s172 = scalar_select %p171, %s168, 3
        %s173 = smul.addr %s172, 2
        %s174 = smul.addr %s170, 8
        %s175 = sadd.s32 %s173, %s174
        %s176 = smul.addr %s175, 4
        %s177 = scalar_lea.vmem %s0, %s176
        %p178 = pneg %p52
        %p179 = pneg %p49
        %p180 = pneg %p73
        %p181 = pneg %p70
        %p182 = pneg %p94
        %p183 = pneg %p91
        %p184 = pneg %p122
        %p185 = pneg %p119
        %s186 = sand.u32 %s109, 1
        %s187 = scalar_lea.sflag [#allocation3], %s186
        %s188 = sand.u32 %s109, 1
        %s189 = smul.addr %s188, 32
        %s190 = scalar_lea.vmem [#allocation2], %s189
        %s191 = smul.u32 4, %s22
        %p192 = scmp.lt.s32.totalorder %s21, 1
        %s193 = scalar_select %p192, %s21, 1
        %p194 = scmp.lt.s32.totalorder %s191, 3
        %s195 = scalar_select %p194, %s191, 3
        %s196 = smul.addr %s195, 2
        %s197 = smul.addr %s193, 8
        %s198 = sadd.s32 %s196, %s197
        %s199 = smul.addr %s198, 4
        %s200 = scalar_lea.vmem %s0, %s199
        %s201 = smul.u32 4, %s22
        %s202 = smul.u32 4, %s22
        %v203 = vld [vmem:[%s200] sm:$0xff]
        %v204 = vld [vmem:[%s200 + $0x8] sm:$0xff]
        %v205 = vld [vmem:[%s200 + $0x10] sm:$0xff]
        %v206 = vld [vmem:[%s200 + $0x18] sm:$0xff]
        %v207 = vld [vmem:[%s1] sm:$0xf]
        %v208 = vld [vmem:[%s1 + $0x8] sm:$0xf]
        %v209 = vld [vmem:[%s1 + $0x10] sm:$0xf]
        %v210 = vld [vmem:[%s1 + $0x18] sm:$0xf]
        %v211 = vld [vmem:[%s1 + $0x20] sm:$0xf]
        %v212 = vld [vmem:[%s1 + $0x28] sm:$0xf]
        %v213 = vld [vmem:[%s1 + $0x30] sm:$0xf]
        %v214 = vld [vmem:[%s1 + $0x38] sm:$0xf]
        %v215 = vld [vmem:[%s1 + $0x40] sm:$0xf]
        %v216 = vld [vmem:[%s1 + $0x48] sm:$0xf]
        %v217 = vld [vmem:[%s1 + $0x50] sm:$0xf]
        %v218 = vld [vmem:[%s1 + $0x58] sm:$0xf]
        %v219 = vld [vmem:[%s1 + $0x60] sm:$0xf]
        %v220 = vld [vmem:[%s1 + $0x68] sm:$0xf]
        %v221 = vld [vmem:[%s1 + $0x70] sm:$0xf]
        %v222 = vld [vmem:[%s1 + $0x78] sm:$0xf]
        %v223 = vld [vmem:[%s1 + $0x80] sm:$0xf]
        %v224 = vld [vmem:[%s1 + $0x88] sm:$0xf]
        %v225 = vld [vmem:[%s1 + $0x90] sm:$0xf]
        %v226 = vld [vmem:[%s1 + $0x98] sm:$0xf]
        %v227 = vld [vmem:[%s1 + $0xa0] sm:$0xf]
        %v228 = vld [vmem:[%s1 + $0xa8] sm:$0xf]
        %v229 = vld [vmem:[%s1 + $0xb0] sm:$0xf]
        %v230 = vld [vmem:[%s1 + $0xb8] sm:$0xf]
        %v231 = vld [vmem:[%s1 + $0xc0] sm:$0xf]
        %v232 = vld [vmem:[%s1 + $0xc8] sm:$0xf]
        %v233 = vld [vmem:[%s1 + $0xd0] sm:$0xf]
        %v234 = vld [vmem:[%s1 + $0xd8] sm:$0xf]
        %v235 = vld [vmem:[%s1 + $0xe0] sm:$0xf]
        %v236 = vld [vmem:[%s1 + $0xe8] sm:$0xf]
        %v237 = vld [vmem:[%s1 + $0xf0] sm:$0xf]
        %v238 = vld [vmem:[%s1 + $0xf8] sm:$0xf]
        %v243 = vunpack.c.l.b16 %v203
        %v244 = vunpack.c.h.b16 %v203
        %v245 = vunpack.c.l.b16 %v204
        %v246 = vunpack.c.h.b16 %v204
        %v247 = vunpack.c.l.b16 %v205
        %v248 = vunpack.c.h.b16 %v205
        %v249 = vunpack.c.l.b16 %v206
        %v250 = vunpack.c.h.b16 %v206
        %v251 = vpack.c.b16 %v245, %v243
        %v252 = vpack.c.b16 %v246, %v244
        %v253 = vpack.c.b16 %v249, %v247
        %v254 = vpack.c.b16 %v250, %v248
        %v291 = vunpack.c.l.b16 %v207
        %v292 = vunpack.c.l.b16 %v208
        %v293 = vunpack.c.l.b16 %v209
        %v294 = vunpack.c.l.b16 %v210
        %v295 = vunpack.c.l.b16 %v211
        %v296 = vunpack.c.l.b16 %v212
        %v297 = vunpack.c.l.b16 %v213
        %v298 = vunpack.c.l.b16 %v214
        %v299 = vunpack.c.l.b16 %v215
        %v300 = vunpack.c.l.b16 %v216
        %v301 = vunpack.c.l.b16 %v217
        %v302 = vunpack.c.l.b16 %v218
        %v303 = vunpack.c.l.b16 %v219
        %v304 = vunpack.c.l.b16 %v220
        %v305 = vunpack.c.l.b16 %v221
        %v306 = vunpack.c.l.b16 %v222
        %v307 = vunpack.c.l.b16 %v223
        %v308 = vunpack.c.l.b16 %v224
        %v309 = vunpack.c.l.b16 %v225
        %v310 = vunpack.c.l.b16 %v226
        %v311 = vunpack.c.l.b16 %v227
        %v312 = vunpack.c.l.b16 %v228
        %v313 = vunpack.c.l.b16 %v229
        %v314 = vunpack.c.l.b16 %v230
        %v315 = vunpack.c.l.b16 %v231
        %v316 = vunpack.c.l.b16 %v232
        %v317 = vunpack.c.l.b16 %v233
        %v318 = vunpack.c.l.b16 %v234
        %v319 = vunpack.c.l.b16 %v235
        %v320 = vunpack.c.l.b16 %v236
        %v321 = vunpack.c.l.b16 %v237
        %v322 = vunpack.c.l.b16 %v238
        %v323 = vpack.c.b16 %v292, %v291
        %v324 = vpack.c.b16 %v294, %v293
        %v325 = vpack.c.b16 %v296, %v295
        %v326 = vpack.c.b16 %v298, %v297
        %v327 = vpack.c.b16 %v300, %v299
        %v328 = vpack.c.b16 %v302, %v301
        %v329 = vpack.c.b16 %v304, %v303
        %v330 = vpack.c.b16 %v306, %v305
        %v331 = vpack.c.b16 %v308, %v307
        %v332 = vpack.c.b16 %v310, %v309
        %v333 = vpack.c.b16 %v312, %v311
        %v334 = vpack.c.b16 %v314, %v313
        %v335 = vpack.c.b16 %v316, %v315
        %v336 = vpack.c.b16 %v318, %v317
        %v337 = vpack.c.b16 %v320, %v319
        %v338 = vpack.c.b16 %v322, %v321
        %355 = vmatpush.bf16.msra.mxu0 %v330
        %356 = vmatpush.bf16.msra.mxu0 %v329
        %357 = vmatpush.bf16.msra.mxu0 %v328
        %358 = vmatpush.bf16.msra.mxu0 %v327
        %359 = vmatpush.bf16.msra.mxu0 %v326
        %360 = vmatpush.bf16.msra.mxu0 %v325
        %361 = vmatpush.bf16.msra.mxu0 %v324
        %362 = vmatpush.bf16.msra.mxu0 %v323
        %363 = vmatmul.bf16.gmra.mxu0 %v251
        %v364 = vpop.f32.mrf.mxu0
        %v365 = vadd.f32 0.0, %v364
        %v366 = vpop.f32.mrf.mxu0
        %v367 = vadd.f32 0.0, %v366
        %368 = vmatmul.bf16.gmra.mxu0 %v253
        %v369 = vpop.f32.mrf.mxu0
        %v370 = vadd.f32 0.0, %v369
        %v371 = vpop.f32.mrf.mxu0
        %v372 = vadd.f32 0.0, %v371
        %373 = vdwg.mxu0
        %374 = vmatpush.bf16.msra.mxu0 %v338
        %375 = vmatpush.bf16.msra.mxu0 %v337
        %376 = vmatpush.bf16.msra.mxu0 %v336
        %377 = vmatpush.bf16.msra.mxu0 %v335
        %378 = vmatpush.bf16.msra.mxu0 %v334
        %379 = vmatpush.bf16.msra.mxu0 %v333
        %380 = vmatpush.bf16.msra.mxu0 %v332
        %381 = vmatpush.bf16.msra.mxu0 %v331
        %382 = vmatmul.bf16.gmra.mxu0 %v252
        %v383 = vpop.f32.mrf.mxu0
        %v384 = vadd.f32 %v365, %v383
        %v385 = vpop.f32.mrf.mxu0
        %v386 = vadd.f32 %v367, %v385
        %387 = vmatmul.bf16.gmra.mxu0 %v254
        %v388 = vpop.f32.mrf.mxu0
        %v389 = vadd.f32 %v370, %v388
        %v390 = vpop.f32.mrf.mxu0
        %v391 = vadd.f32 %v372, %v390
        %392 = vdwg.mxu0
        %v393 = vmul.f32 %v384, %v384
        %v394 = vmul.f32 %v386, %v386
        %v395 = vmul.f32 %v389, %v389
        %v396 = vmul.f32 %v391, %v391
        %v397 = vld [vmem:[%s1 + $0x4] sm:$0xf]
        %v398 = vld [vmem:[%s1 + $0xc] sm:$0xf]
        %v399 = vld [vmem:[%s1 + $0x14] sm:$0xf]
        %v400 = vld [vmem:[%s1 + $0x1c] sm:$0xf]
        %v401 = vld [vmem:[%s1 + $0x24] sm:$0xf]
        %v402 = vld [vmem:[%s1 + $0x2c] sm:$0xf]
        %v403 = vld [vmem:[%s1 + $0x34] sm:$0xf]
        %v404 = vld [vmem:[%s1 + $0x3c] sm:$0xf]
        %v405 = vld [vmem:[%s1 + $0x44] sm:$0xf]
        %v406 = vld [vmem:[%s1 + $0x4c] sm:$0xf]
        %v407 = vld [vmem:[%s1 + $0x54] sm:$0xf]
        %v408 = vld [vmem:[%s1 + $0x5c] sm:$0xf]
        %v409 = vld [vmem:[%s1 + $0x64] sm:$0xf]
        %v410 = vld [vmem:[%s1 + $0x6c] sm:$0xf]
        %v411 = vld [vmem:[%s1 + $0x74] sm:$0xf]
        %v412 = vld [vmem:[%s1 + $0x7c] sm:$0xf]
        %v413 = vld [vmem:[%s1 + $0x84] sm:$0xf]
        %v414 = vld [vmem:[%s1 + $0x8c] sm:$0xf]
        %v415 = vld [vmem:[%s1 + $0x94] sm:$0xf]
        %v416 = vld [vmem:[%s1 + $0x9c] sm:$0xf]
        %v417 = vld [vmem:[%s1 + $0xa4] sm:$0xf]
        %v418 = vld [vmem:[%s1 + $0xac] sm:$0xf]
        %v419 = vld [vmem:[%s1 + $0xb4] sm:$0xf]
        %v420 = vld [vmem:[%s1 + $0xbc] sm:$0xf]
        %v421 = vld [vmem:[%s1 + $0xc4] sm:$0xf]
        %v422 = vld [vmem:[%s1 + $0xcc] sm:$0xf]
        %v423 = vld [vmem:[%s1 + $0xd4] sm:$0xf]
        %v424 = vld [vmem:[%s1 + $0xdc] sm:$0xf]
        %v425 = vld [vmem:[%s1 + $0xe4] sm:$0xf]
        %v426 = vld [vmem:[%s1 + $0xec] sm:$0xf]
        %v427 = vld [vmem:[%s1 + $0xf4] sm:$0xf]
        %v428 = vld [vmem:[%s1 + $0xfc] sm:$0xf]
        %v461 = vunpack.c.l.b16 %v397
        %v462 = vunpack.c.l.b16 %v398
        %v463 = vunpack.c.l.b16 %v399
        %v464 = vunpack.c.l.b16 %v400
        %v465 = vunpack.c.l.b16 %v401
        %v466 = vunpack.c.l.b16 %v402
        %v467 = vunpack.c.l.b16 %v403
        %v468 = vunpack.c.l.b16 %v404
        %v469 = vunpack.c.l.b16 %v405
        %v470 = vunpack.c.l.b16 %v406
        %v471 = vunpack.c.l.b16 %v407
        %v472 = vunpack.c.l.b16 %v408
        %v473 = vunpack.c.l.b16 %v409
        %v474 = vunpack.c.l.b16 %v410
        %v475 = vunpack.c.l.b16 %v411
        %v476 = vunpack.c.l.b16 %v412
        %v477 = vunpack.c.l.b16 %v413
        %v478 = vunpack.c.l.b16 %v414
        %v479 = vunpack.c.l.b16 %v415
        %v480 = vunpack.c.l.b16 %v416
        %v481 = vunpack.c.l.b16 %v417
        %v482 = vunpack.c.l.b16 %v418
        %v483 = vunpack.c.l.b16 %v419
        %v484 = vunpack.c.l.b16 %v420
        %v485 = vunpack.c.l.b16 %v421
        %v486 = vunpack.c.l.b16 %v422
        %v487 = vunpack.c.l.b16 %v423
        %v488 = vunpack.c.l.b16 %v424
        %v489 = vunpack.c.l.b16 %v425
        %v490 = vunpack.c.l.b16 %v426
        %v491 = vunpack.c.l.b16 %v427
        %v492 = vunpack.c.l.b16 %v428
        %v493 = vpack.c.b16 %v462, %v461
        %v494 = vpack.c.b16 %v464, %v463
        %v495 = vpack.c.b16 %v466, %v465
        %v496 = vpack.c.b16 %v468, %v467
        %v497 = vpack.c.b16 %v470, %v469
        %v498 = vpack.c.b16 %v472, %v471
        %v499 = vpack.c.b16 %v474, %v473
        %v500 = vpack.c.b16 %v476, %v475
        %v501 = vpack.c.b16 %v478, %v477
        %v502 = vpack.c.b16 %v480, %v479
        %v503 = vpack.c.b16 %v482, %v481
        %v504 = vpack.c.b16 %v484, %v483
        %v505 = vpack.c.b16 %v486, %v485
        %v506 = vpack.c.b16 %v488, %v487
        %v507 = vpack.c.b16 %v490, %v489
        %v508 = vpack.c.b16 %v492, %v491
        %525 = vmatpush.bf16.msra.mxu0 %v500
        %526 = vmatpush.bf16.msra.mxu0 %v499
        %527 = vmatpush.bf16.msra.mxu0 %v498
        %528 = vmatpush.bf16.msra.mxu0 %v497
        %529 = vmatpush.bf16.msra.mxu0 %v496
        %530 = vmatpush.bf16.msra.mxu0 %v495
        %531 = vmatpush.bf16.msra.mxu0 %v494
        %532 = vmatpush.bf16.msra.mxu0 %v493
        %533 = vmatmul.bf16.gmra.mxu0 %v251
        %v534 = vpop.f32.mrf.mxu0
        %v535 = vadd.f32 0.0, %v534
        %v536 = vpop.f32.mrf.mxu0
        %v537 = vadd.f32 0.0, %v536
        %538 = vmatmul.bf16.gmra.mxu0 %v253
        %v539 = vpop.f32.mrf.mxu0
        %v540 = vadd.f32 0.0, %v539
        %v541 = vpop.f32.mrf.mxu0
        %v542 = vadd.f32 0.0, %v541
        %543 = vdwg.mxu0
        %544 = vmatpush.bf16.msra.mxu0 %v508
        %545 = vmatpush.bf16.msra.mxu0 %v507
        %546 = vmatpush.bf16.msra.mxu0 %v506
        %547 = vmatpush.bf16.msra.mxu0 %v505
        %548 = vmatpush.bf16.msra.mxu0 %v504
        %549 = vmatpush.bf16.msra.mxu0 %v503
        %550 = vmatpush.bf16.msra.mxu0 %v502
        %551 = vmatpush.bf16.msra.mxu0 %v501
        %552 = vmatmul.bf16.gmra.mxu0 %v252
        %v553 = vpop.f32.mrf.mxu0
        %v554 = vadd.f32 %v535, %v553
        %v555 = vpop.f32.mrf.mxu0
        %v556 = vadd.f32 %v537, %v555
        %557 = vmatmul.bf16.gmra.mxu0 %v254
        %v558 = vpop.f32.mrf.mxu0
        %v559 = vadd.f32 %v540, %v558
        %v560 = vpop.f32.mrf.mxu0
        %v561 = vadd.f32 %v542, %v560
        %562 = vdwg.mxu0
        %v563 = vmul.f32 %v554, %v554
        %v564 = vmul.f32 %v556, %v556
        %v565 = vmul.f32 %v559, %v559
        %v566 = vmul.f32 %v561, %v561
        %v567 = vadd.f32 %v393, %v563
        %v568 = vadd.f32 %v394, %v564
        %v569 = vadd.f32 %v395, %v565
        %v570 = vadd.f32 %v396, %v566
        %v571 = vpack.c.bf16 %v568, %v567
        %v572 = vpack.c.bf16 %v570, %v569
        %v573 = vld [vmem:[%s2] sm:$0xf]
        %v574 = vld [vmem:[%s2 + $0x4] sm:$0xf]
        %v575 = vld [vmem:[%s2 + $0x8] sm:$0xf]
        %v576 = vld [vmem:[%s2 + $0xc] sm:$0xf]
        %v577 = vld [vmem:[%s2 + $0x10] sm:$0xf]
        %v578 = vld [vmem:[%s2 + $0x14] sm:$0xf]
        %v579 = vld [vmem:[%s2 + $0x18] sm:$0xf]
        %v580 = vld [vmem:[%s2 + $0x1c] sm:$0xf]
        %v581 = vld [vmem:[%s2 + $0x20] sm:$0xf]
        %v582 = vld [vmem:[%s2 + $0x24] sm:$0xf]
        %v583 = vld [vmem:[%s2 + $0x28] sm:$0xf]
        %v584 = vld [vmem:[%s2 + $0x2c] sm:$0xf]
        %v585 = vld [vmem:[%s2 + $0x30] sm:$0xf]
        %v586 = vld [vmem:[%s2 + $0x34] sm:$0xf]
        %v587 = vld [vmem:[%s2 + $0x38] sm:$0xf]
        %v588 = vld [vmem:[%s2 + $0x3c] sm:$0xf]
        %v605 = vunpack.c.l.b16 %v573
        %v606 = vunpack.c.l.b16 %v574
        %v607 = vunpack.c.l.b16 %v575
        %v608 = vunpack.c.l.b16 %v576
        %v609 = vunpack.c.l.b16 %v577
        %v610 = vunpack.c.l.b16 %v578
        %v611 = vunpack.c.l.b16 %v579
        %v612 = vunpack.c.l.b16 %v580
        %v613 = vunpack.c.l.b16 %v581
        %v614 = vunpack.c.l.b16 %v582
        %v615 = vunpack.c.l.b16 %v583
        %v616 = vunpack.c.l.b16 %v584
        %v617 = vunpack.c.l.b16 %v585
        %v618 = vunpack.c.l.b16 %v586
        %v619 = vunpack.c.l.b16 %v587
        %v620 = vunpack.c.l.b16 %v588
        %v621 = vpack.c.b16 %v606, %v605
        %v622 = vpack.c.b16 %v608, %v607
        %v623 = vpack.c.b16 %v610, %v609
        %v624 = vpack.c.b16 %v612, %v611
        %v625 = vpack.c.b16 %v614, %v613
        %v626 = vpack.c.b16 %v616, %v615
        %v627 = vpack.c.b16 %v618, %v617
        %v628 = vpack.c.b16 %v620, %v619
        %637 = vmatpush.bf16.msra.mxu0 %v628
        %638 = vmatpush.bf16.msra.mxu0 %v627
        %639 = vmatpush.bf16.msra.mxu0 %v626
        %640 = vmatpush.bf16.msra.mxu0 %v625
        %641 = vmatpush.bf16.msra.mxu0 %v624
        %642 = vmatpush.bf16.msra.mxu0 %v623
        %643 = vmatpush.bf16.msra.mxu0 %v622
        %644 = vmatpush.bf16.msra.mxu0 %v621
        %645 = vmatmul.bf16.gmra.mxu0 %v571
        %v646 = vpop.f32.mrf.mxu0
        %v647 = vadd.f32 1e-05, %v646
        %v648 = vpop.f32.mrf.mxu0
        %v649 = vadd.f32 1e-05, %v648
        %650 = vmatmul.bf16.gmra.mxu0 %v572
        %v651 = vpop.f32.mrf.mxu0
        %v652 = vadd.f32 1e-05, %v651
        %v653 = vpop.f32.mrf.mxu0
        %v654 = vadd.f32 1e-05, %v653
        %655 = vdwg.mxu0
        %v656 = vlog2.pop %v647
        %v657 = vmul.f32 %v656, 0.6931472
        %v658 = vlog2.pop %v649
        %v659 = vmul.f32 %v658, 0.6931472
        %v660 = vlog2.pop %v652
        %v661 = vmul.f32 %v660, 0.6931472
        %v662 = vlog2.pop %v654
        %v663 = vmul.f32 %v662, 0.6931472
        %v664 = vmul.f32 %v657, 0.2
        %v665 = vmul.f32 %v659, 0.2
        %v666 = vmul.f32 %v661, 0.2
        %v667 = vmul.f32 %v663, 0.2
        %v668 = vadd.f32 %v664, 0.9
        %v669 = vadd.f32 %v665, 0.9
        %v670 = vadd.f32 %v666, 0.9
        %v671 = vadd.f32 %v667, 0.9
        %672 = vst [vmem:[%s190] sm:$0xff] %v668
        %673 = vst [vmem:[%s190 + $0x8] sm:$0xff] %v669
        %674 = vst [vmem:[%s190 + $0x10] sm:$0xff] %v670
        %675 = vst [vmem:[%s190 + $0x18] sm:$0xff] %v671
        %s676 = sand.u32 %s109, 1
        %s677 = scalar_lea.sflag [#allocation3], %s676
        %s678 = sand.u32 %s109, 1
        %s679 = smul.addr %s678, 32
        %s680 = scalar_lea.vmem [#allocation2], %s679
        // Predicated region
        $region33: #{_forward_impl.1} parent=31 // pred_check
          %p681 = pneg %p119
        $region34: #{_forward_impl.1} parent=31 // pred_check_branch
          %683 = sbr.rel (%p681) target = $region36
        $region35: #{_forward_impl.1} parent=31 // pred_region
          %s684 = smul.u32 4, %s22
          %686 = vsyncadd %s677, 0
          %s687 = smul.addr %s21, 4
          %s688 = sadd.s32 %s684, %s687
          %s689 = smul.addr %s688, 8
          %s690 = scalar_lea.hbm %s3, %s689
          %s691 = sshll.u32 %s680, 4
          %s692 = int_to_ptr.vmem [resolvable:$true] %s691
          %s693 = sshll.u32 %s690, 4
          %s694 = int_to_ptr.hbm [resolvable:$true] %s693
          %699 = dma.vmem_to_hbm [thread:$0]  %s692, 512, %s694, %s677, 128, 128, 8
        $region36: #{_forward_impl.1} parent=31 // pred_fallthru
          _
      $region32: #{_forward_impl.1} parent=5 // pred_fallthru
        _
      %p700 = scmp.le.s32.totalorder 2, %s12
      // Predicated region
      $region37: #{_forward_impl.1} parent=5 // pred_check
        %p701 = pneg %p700
      $region38: #{_forward_impl.1} parent=5 // pred_check_branch
        %703 = sbr.rel (%p701) target = $region40
      $region39: #{_forward_impl.1} parent=5 // pred_region
        %s704 = ssub.s32 %s12, 2
        // Predicated region
        $region41: #{_forward_impl.1} parent=39 // pred_check
          %p705 = pneg %p125
        $region42: #{_forward_impl.1} parent=39 // pred_check_branch
          %707 = sbr.rel (%p705) target = $region44
        $region43: #{_forward_impl.1} parent=39 // pred_region
          %s708 = sand.u32 %s110, 1
          %s709 = scalar_lea.sflag [#allocation3], %s708
          %s710 = sand.u32 %s110, 1
          %s711 = smul.addr %s710, 32
          %s712 = scalar_lea.vmem [#allocation2], %s711
          %714 = dma.done %s709, 512
        $region44: #{_forward_impl.1} parent=39 // pred_fallthru
          _
      $region40: #{_forward_impl.1} parent=5 // pred_fallthru
        _
    $region6: #{_forward_impl.1} parent=1 // loop_footer
      %s16 = sadd.s32 1, %s12
    $region7: #{_forward_impl.1} parent=1 // loop_footer_branch
      %11 = sbr.rel target = $region3
    $region8: #{_forward_impl.1} parent=1 // loop_exit
      _
    %715 = vsyncpa [#allocation3], 1
    %s716 = scalar_lea.sflag [#allocation3], 1
    %717 = vsyncpa %s716, 1

</llo_original>
